<compile_context>
chip_gen: v7x
topology: tpu7x:2x2x1
jax: 0.10.0
libtpu: 0.0.40
codegen_flags: <defaults>
</compile_context>

<pallas_src>
import numpy as np
import jax
import jax.numpy as jnp
from jax.experimental import pallas as pl
from jax.experimental.pallas import tpu as pltpu


def _round_up(x, m):
    return ((x + m - 1) // m) * m


def make_gaussian_layer(input_size, output_size, grid_range, grid_count, coef,
                        *, use_bf16_mxu=False, dtype=jnp.float32):
    """Build a forward(x) callable closing over a pre-fused weight matrix.

    coef: (output_size, input_size, grid_count), PyTorch parameter layout.
    """
    I, O, G = input_size, output_size, grid_count
    K = I * G

    zoom = (grid_range[-1] - grid_range[0]) / 2.0
    pan = (grid_range[-1] + grid_range[0]) / 2.0
    # NOTE: same division-by-zero edge case as the PyTorch module if grid_count==1.
    width = zoom / (grid_count - 1)
    inv_width = 1.0 / width
    centers = np.linspace(grid_range[0], grid_range[-1], grid_count).astype(np.float32)

    # ---- one-time weight prep (hoisted out of forward): fused (K, O_pad) ----
    O_pad = _round_up(O, 128)
    # coef (O,I,G) -> (G,I,O) -> (K=G*I, O); row g*I+i <-> coef[:, i, g]
    w = jnp.transpose(jnp.asarray(coef, jnp.float32), (2, 1, 0)).reshape(K, O)
    w = jnp.pad(w, ((0, 0), (0, O_pad - O)))
    if use_bf16_mxu:
        w = w.astype(jnp.bfloat16)
    # centers expanded along lanes: centers_row[0, g*I+i] = centers[g]
    centers_row = jnp.asarray(np.repeat(centers, I)[None, :], jnp.float32)  # (1, K)

    def kernel(x_ref, c_ref, w_ref, o_ref):
        # x_ref: (tile_b, I), c_ref: (1, K), w_ref: (K, tile_o), o_ref: (tile_b, tile_o)
        xt = jnp.tanh(x_ref[...].astype(jnp.float32)) * zoom + pan      # (tile_b, I)
        # Lane-dense expansion: (tile_b, K) with block g holding xt.
        xe = jnp.concatenate([xt] * G, axis=-1)                          # (tile_b, K)
        d = (xe - c_ref[...]) * inv_width
        e = jnp.exp(-0.5 * d * d)                                        # (tile_b, K)
        if use_bf16_mxu:
            e = e.astype(jnp.bfloat16)
        # Single fused MXU matmul, f32 accumulation.
        o_ref[...] = jnp.dot(e, w_ref[...],
                             preferred_element_type=jnp.float32).astype(o_ref.dtype)

    def forward(x):
        B = x.shape[0]
        # Row tiling: keep whole (padded) batch in one tile while small,
        # otherwise tile at 256 rows per grid step.
        if B <= 256:
            tile_b = _round_up(B, 8)
            B_pad = tile_b
        else:
            tile_b = 256
            B_pad = _round_up(B, tile_b)
        tile_o = O_pad if O_pad <= 512 else 512
        O_pad2 = _round_up(O_pad, tile_o)

        x_p = jnp.pad(x.astype(jnp.float32),
                      ((0, B_pad - B), (0, 0)))
        w_p = w if O_pad2 == O_pad else jnp.pad(w, ((0, 0), (0, O_pad2 - O_pad)))

        grid = (B_pad // tile_b, O_pad2 // tile_o)

        cost = pl.CostEstimate(
            flops=2 * B_pad * K * O_pad2,
            transcendentals=B_pad * (I + K),          # tanh + exp
            bytes_accessed=4 * (B_pad * I + K * O_pad2 + B_pad * O_pad2 + K),
        )

        out = pl.pallas_call(
            kernel,
            out_shape=jax.ShapeDtypeStruct((B_pad, O_pad2), dtype),
            grid=grid,
            in_specs=[
                pl.BlockSpec((tile_b, I), lambda bi, oi: (bi, 0)),
                pl.BlockSpec((1, K), lambda bi, oi: (0, 0)),
                pl.BlockSpec((K, tile_o), lambda bi, oi: (0, oi)),
            ],
            out_specs=pl.BlockSpec((tile_b, tile_o), lambda bi, oi: (bi, oi)),
            compiler_params=pltpu.CompilerParams(
                dimension_semantics=("parallel", "parallel")),
            cost_estimate=cost,
        )(x_p, centers_row, w_p)

        return out[:B, :O]

    return forward


def reference_forward(x, coef, grid_range, grid_count):
    """Pure-JAX reference mirroring the PyTorch forward."""
    zoom = (grid_range[-1] - grid_range[0]) / 2.0
    pan = (grid_range[-1] + grid_range[0]) / 2.0
    width = zoom / (grid_count - 1)
    centers = jnp.linspace(grid_range[0], grid_range[-1], grid_count)
    xt = jnp.tanh(x) * zoom + pan                                   # (B, I)
    e = jnp.exp(-0.5 * ((xt[:, :, None] - centers[None, None, :]) / width) ** 2)
    # out[b,o] = sum_i sum_g coef[o,i,g] * e[b,i,g]
    return jnp.einsum("big,oig->bo", e, coef)


if __name__ == "__main__":
    # Small, deterministic setup consistent with the module's __init__.
    batch = 8
    input_size = 32
    output_size = 16
    grid_range = [-1.0, 1.0]
    grid_count = 8

    key = jax.random.PRNGKey(0)
    kx, kc = jax.random.split(key)
    x = jax.random.normal(kx, (batch, input_size), dtype=jnp.float32)
    # nn.Parameter(torch.randn(output_size, input_size, grid_count) * 0.1)
    coef = jax.random.normal(kc, (output_size, input_size, grid_count),
                             dtype=jnp.float32) * 0.1

    fwd = make_gaussian_layer(input_size, output_size, grid_range, grid_count,
                              coef, use_bf16_mxu=False)
    out = jax.block_until_ready(fwd(x))

    ref = jax.block_until_ready(reference_forward(x, coef, grid_range, grid_count))
    assert out.shape == (batch, output_size)
    np.testing.assert_allclose(np.asarray(out), np.asarray(ref),
                               rtol=1e-5, atol=1e-5)
    print("KERNEL_OK")
</pallas_src>

<mosaic_0001>
module attributes {stable_mosaic.version = 11 : i64} {
  func.func @kernel(%arg0: i32, %arg1: i32, %arg2: memref<8x32xf32, #tpu.memory_space<vmem>>, %arg3: memref<1x256xf32, #tpu.memory_space<vmem>>, %arg4: memref<256x128xf32, #tpu.memory_space<vmem>>, %arg5: memref<8x128xf32, #tpu.memory_space<vmem>>) attributes {dimension_semantics = [#tpu.dimension_semantics<parallel>, #tpu.dimension_semantics<parallel>], iteration_bounds = array<i64: 1, 1>, scalar_prefetch = 0 : i64, scratch_operands = 0 : i64, tpu.core_type = #tpu.core_type<tc>, window_params = [{transform_indices = @transform_0, window_bounds = array<i64: 8, 32>}, {pipeline_mode = #tpu.pipeline_mode<synchronous>, transform_indices = @transform_1, window_bounds = array<i64: 1, 256>}, {transform_indices = @transform_2, window_bounds = array<i64: 256, 128>}, {transform_indices = @transform_3, window_bounds = array<i64: 8, 128>}]} {
    %c0 = arith.constant 0 : index
    %c0_0 = arith.constant 0 : index
    %0 = vector.load %arg2[%c0, %c0_0] : memref<8x32xf32, #tpu.memory_space<vmem>>, vector<8x32xf32>
    %1 = math.tanh %0 : vector<8x32xf32>
    %cst = arith.constant 1.000000e+00 : f32
    %2 = vector.broadcast %cst : f32 to vector<8x32xf32>
    %3 = arith.mulf %1, %2 : vector<8x32xf32>
    %cst_1 = arith.constant 0.000000e+00 : f32
    %4 = vector.broadcast %cst_1 : f32 to vector<8x32xf32>
    %5 = arith.addf %3, %4 : vector<8x32xf32>
    %6 = tpu.concatenate %5, %5, %5, %5, %5, %5, %5, %5 in 1 : vector<8x32xf32>, vector<8x32xf32>, vector<8x32xf32>, vector<8x32xf32>, vector<8x32xf32>, vector<8x32xf32>, vector<8x32xf32>, vector<8x32xf32> -> vector<8x256xf32>
    %c0_2 = arith.constant 0 : index
    %c0_3 = arith.constant 0 : index
    %7 = vector.load %arg3[%c0_2, %c0_3] : memref<1x256xf32, #tpu.memory_space<vmem>>, vector<1x256xf32>
    %8 = vector.broadcast %7 : vector<1x256xf32> to vector<8x256xf32>
    %9 = arith.subf %6, %8 : vector<8x256xf32>
    %cst_4 = arith.constant 7.000000e+00 : f32
    %10 = vector.broadcast %cst_4 : f32 to vector<8x256xf32>
    %11 = arith.mulf %9, %10 : vector<8x256xf32>
    %cst_5 = arith.constant -5.000000e-01 : f32
    %12 = vector.broadcast %cst_5 : f32 to vector<8x256xf32>
    %13 = arith.mulf %12, %11 : vector<8x256xf32>
    %14 = arith.mulf %13, %11 : vector<8x256xf32>
    %15 = math.exp %14 : vector<8x256xf32>
    %c0_6 = arith.constant 0 : index
    %c0_7 = arith.constant 0 : index
    %16 = vector.load %arg4[%c0_6, %c0_7] : memref<256x128xf32, #tpu.memory_space<vmem>>, vector<256x128xf32>
    %cst_8 = arith.constant dense<0.000000e+00> : vector<8x128xf32>
    %17 = tpu.matmul %15, %16, %cst_8 {dimension_numbers = #tpu.dot_dimension_numbers<[1], [0], [0], [1], [0, 0, 1, 1], [], []>} : vector<8x256xf32>, vector<256x128xf32>, vector<8x128xf32> -> vector<8x128xf32>
    %c0_9 = arith.constant 0 : index
    %c0_10 = arith.constant 0 : index
    %18 = vector.load %arg5[%c0_9, %c0_10] : memref<8x128xf32, #tpu.memory_space<vmem>>, vector<8x128xf32>
    tpu.vector_store %arg5[%c0_9, %c0_10], %17 {strides = array<i32>} : memref<8x128xf32, #tpu.memory_space<vmem>>, vector<8x128xf32>,
    return
  }
  func.func @transform_0(%arg0: i32, %arg1: i32) -> (i32, i32) {
    %c0_i32 = arith.constant 0 : i32
    %c0_i32_0 = arith.constant 0 : i32
    return %arg0, %c0_i32 : i32, i32
  }
  func.func @transform_1(%arg0: i32, %arg1: i32) -> (i32, i32) {
    %c0_i32 = arith.constant 0 : i32
    %c0_i32_0 = arith.constant 0 : i32
    %c0_i32_1 = arith.constant 0 : i32
    return %c0_i32, %c0_i32_0 : i32, i32
  }
  func.func @transform_2(%arg0: i32, %arg1: i32) -> (i32, i32) {
    %c0_i32 = arith.constant 0 : i32
    %c0_i32_0 = arith.constant 0 : i32
    return %c0_i32, %arg1 : i32, i32
  }
  func.func @transform_3(%arg0: i32, %arg1: i32) -> (i32, i32) {
    %c0_i32 = arith.constant 0 : i32
    return %arg0, %arg1 : i32, i32
  }
}

</mosaic_0001>

<llo_original>
// kernel: tpu_custom_call.1
$region0: #{tpu_custom_call.1}
  #allocation0 [shape = 'u32[]', space=smem, size = 0x4, offset = 0x4, fixed_abs, tag = 'smem constant byte address 0x4 - core index']
  #allocation1 [shape = 'u32[144,128]{1,0:T(1,128)}', space=vmem, size = 0x12000, scoped, tag = 'internal scratch']
  %s0 = inlined_call_operand.hbm [shape: f32[8,32], index: 0, kind: input, shape index: {}]
  %s1 = inlined_call_operand.vmem [shape: f32[1,256], index: 1, kind: input, shape index: {}]
  %s2 = inlined_call_operand.hbm [shape: f32[256,128], index: 2, kind: input, shape index: {}]
  %s3 = inlined_call_operand.hbm [shape: f32[8,128], index: 3, kind: output, shape index: {}]
  %s4 = sld [smem:[#allocation0]]
  $region30: #{tpu_custom_call.1} parent=0
    _
  %s6 = ssub.s32 1, %s4
  %s7 = scalar_select 0, %s6, %s4
  $region1: #{tpu_custom_call.1} parent=0
    #allocation2 [shape = 'u8[4096]{0}', space=vmem, size = 0x1000, scoped, tag = 'input window, operand 0, single buffered']
    #allocation3 [shape = 's32[1]{0}', space=sflag, size = 0x4, scoped, tag = 'scoped memory for tpu_custom_call.1']
    #allocation4 [shape = 's32[1]{0}', space=sflag, size = 0x4, scoped, tag = 'scoped memory for tpu_custom_call.1']
    #allocation5 [shape = 'u8[131072]{0}', space=vmem, size = 0x20000, scoped, tag = 'input window, operand 2, single buffered']
    #allocation6 [shape = 's32[1]{0}', space=sflag, size = 0x4, scoped, tag = 'scoped memory for tpu_custom_call.1']
    #allocation7 [shape = 'u8[4096]{0}', space=vmem, size = 0x1000, scoped, tag = 'output window, operand 0, single buffered']
    %8 = vsyncpa [#allocation3], 0
    %9 = vsyncpa [#allocation6], 0
    %10 = vsyncpa [#allocation4], 0
    // Predicated region
    $region2: #{tpu_custom_call.1} parent=1 // pred_check
      _
    $region3: #{tpu_custom_call.1} parent=1 // pred_check_branch
      %12 = sbr.rel (0) target = $region5
    $region4: #{tpu_custom_call.1} parent=1 // pred_region
      %s14 = ssub.s32 128, 128
      %15 = vsyncadd [#allocation3], %s14
      %s17 = sshll.u32 [#allocation2], 4
      %s18 = int_to_ptr.vmem [resolvable:$true] %s17
      %20 = dma.hbm_to_vmem [thread:$0]  %s0, 128, %s18, [#allocation3]
    $region5: #{tpu_custom_call.1} parent=1 // pred_fallthru
      _
    // Predicated region
    $region6: #{tpu_custom_call.1} parent=1 // pred_check
      _
    $region7: #{tpu_custom_call.1} parent=1 // pred_check_branch
      %22 = sbr.rel (0) target = $region9
    $region8: #{tpu_custom_call.1} parent=1 // pred_region
      _
    $region9: #{tpu_custom_call.1} parent=1 // pred_fallthru
      _
    // Predicated region
    $region10: #{tpu_custom_call.1} parent=1 // pred_check
      _
    $region11: #{tpu_custom_call.1} parent=1 // pred_check_branch
      %24 = sbr.rel (0) target = $region13
    $region12: #{tpu_custom_call.1} parent=1 // pred_region
      %s26 = ssub.s32 4096, 4096
      %27 = vsyncadd [#allocation6], %s26
      %s28 = sshll.u32 [#allocation5], 4
      %s29 = int_to_ptr.vmem [resolvable:$true] %s28
      %34 = dma.hbm_to_vmem [thread:$0]  %s2, 4096, %s29, [#allocation6], 128, 128, 8
    $region13: #{tpu_custom_call.1} parent=1 // pred_fallthru
      _
    // Predicated region
    $region14: #{tpu_custom_call.1} parent=1 // pred_check
      _
    $region15: #{tpu_custom_call.1} parent=1 // pred_check_branch
      %36 = sbr.rel (0) target = $region17
    $region16: #{tpu_custom_call.1} parent=1 // pred_region
      %37 = dma.done [#allocation3], 128
    $region17: #{tpu_custom_call.1} parent=1 // pred_fallthru
      _
    // Predicated region
    $region18: #{tpu_custom_call.1} parent=1 // pred_check
      _
    $region19: #{tpu_custom_call.1} parent=1 // pred_check_branch
      %39 = sbr.rel (0) target = $region21
    $region20: #{tpu_custom_call.1} parent=1 // pred_region
      %40 = dma.done [#allocation6], 4096
    $region21: #{tpu_custom_call.1} parent=1 // pred_fallthru
      _
    %v41 = vld [vmem:[#allocation2] sm:$0xff]
    %v42 = vtanh.pop %v41
    %v43 = vadd.f32 %v42, 0.0
    %45 = vrot.lane.b32.xlu0 %v43, 32
    %v46 = vpop.permute.xlu0 %45
    %48 = vrot.lane.b32.xlu0 %v43, 64
    %v49 = vpop.permute.xlu0 %48
    %51 = vrot.lane.b32.xlu0 %v43, 96
    %v52 = vpop.permute.xlu0 %51
    %vm54 = vcmask 261120
    %v55 = vsel %vm54, %v43, %v46
    %vm56 = vcmask 523264
    %v57 = vsel %vm56, %v55, %v49
    %vm58 = vcmask 785408
    %v59 = vsel %vm58, %v57, %v52
    %v60 = vld [vmem:[%s1] sm:$0x3]
    %v62 = vlaneseq
    %v63 = vshrl.u32 %v62, 7
    %v64 = vsub.s32 0, %v63
    %v65 = vrot.slane %v60, %v64
    %v66 = vlaneseq
    %v67 = vshrl.u32 %v66, 7
    %v68 = vsub.s32 1, %v67
    %v69 = vrot.slane %v60, %v68
    %v72 = vsub.f32 %v59, %v65
    %v73 = vsub.f32 %v59, %v69
    %v74 = vmul.f32 %v72, 7.0
    %v75 = vmul.f32 %v73, 7.0
    %v76 = vmul.f32 %v74, -0.5
    %v77 = vmul.f32 %v75, -0.5
    %v78 = vmul.f32 %v76, %v74
    %v79 = vmul.f32 %v77, %v75
    %v80 = vmul.f32 %v78, 1.442695
    %v81 = vpow.pop %v80
    %v82 = vmul.f32 %v79, 1.442695
    %v83 = vpow.pop %v82
    %v84 = vld [vmem:[#allocation5] sm:$0xff]
    %v85 = vld [vmem:[#allocation5 + $0x8] sm:$0xff]
    %v86 = vld [vmem:[#allocation5 + $0x10] sm:$0xff]
    %v87 = vld [vmem:[#allocation5 + $0x18] sm:$0xff]
    %v88 = vld [vmem:[#allocation5 + $0x20] sm:$0xff]
    %v89 = vld [vmem:[#allocation5 + $0x28] sm:$0xff]
    %v90 = vld [vmem:[#allocation5 + $0x30] sm:$0xff]
    %v91 = vld [vmem:[#allocation5 + $0x38] sm:$0xff]
    %v92 = vld [vmem:[#allocation5 + $0x40] sm:$0xff]
    %v93 = vld [vmem:[#allocation5 + $0x48] sm:$0xff]
    %v94 = vld [vmem:[#allocation5 + $0x50] sm:$0xff]
    %v95 = vld [vmem:[#allocation5 + $0x58] sm:$0xff]
    %v96 = vld [vmem:[#allocation5 + $0x60] sm:$0xff]
    %v97 = vld [vmem:[#allocation5 + $0x68] sm:$0xff]
    %v98 = vld [vmem:[#allocation5 + $0x70] sm:$0xff]
    %v99 = vld [vmem:[#allocation5 + $0x78] sm:$0xff]
    %v100 = vld [vmem:[#allocation5 + $0x80] sm:$0xff]
    %v101 = vld [vmem:[#allocation5 + $0x88] sm:$0xff]
    %v102 = vld [vmem:[#allocation5 + $0x90] sm:$0xff]
    %v103 = vld [vmem:[#allocation5 + $0x98] sm:$0xff]
    %v104 = vld [vmem:[#allocation5 + $0xa0] sm:$0xff]
    %v105 = vld [vmem:[#allocation5 + $0xa8] sm:$0xff]
    %v106 = vld [vmem:[#allocation5 + $0xb0] sm:$0xff]
    %v107 = vld [vmem:[#allocation5 + $0xb8] sm:$0xff]
    %v108 = vld [vmem:[#allocation5 + $0xc0] sm:$0xff]
    %v109 = vld [vmem:[#allocation5 + $0xc8] sm:$0xff]
    %v110 = vld [vmem:[#allocation5 + $0xd0] sm:$0xff]
    %v111 = vld [vmem:[#allocation5 + $0xd8] sm:$0xff]
    %v112 = vld [vmem:[#allocation5 + $0xe0] sm:$0xff]
    %v113 = vld [vmem:[#allocation5 + $0xe8] sm:$0xff]
    %v114 = vld [vmem:[#allocation5 + $0xf0] sm:$0xff]
    %v115 = vld [vmem:[#allocation5 + $0xf8] sm:$0xff]
    %116 = vmatprep.subr.mxu0 0.0
    %117 = vmatpush1.msra.mxu0 %v84
    %118 = vmatprep.subr.mxu0 0.0
    %119 = vmatpush1.msra.mxu0 %v85
    %120 = vmatprep.subr.mxu0 0.0
    %121 = vmatpush1.msra.mxu0 %v86
    %122 = vmatprep.subr.mxu0 0.0
    %123 = vmatpush1.msra.mxu0 %v87
    %124 = vmatprep.subr.mxu0 0.0
    %125 = vmatpush1.msra.mxu0 %v88
    %126 = vmatprep.subr.mxu0 0.0
    %127 = vmatpush1.msra.mxu0 %v89
    %128 = vmatprep.subr.mxu0 0.0
    %129 = vmatpush1.msra.mxu0 %v90
    %130 = vmatprep.subr.mxu0 0.0
    %131 = vmatpush1.msra.mxu0 %v91
    %132 = vmatprep.subr.mxu0 0.0
    %133 = vmatpush1.msra.mxu0 %v92
    %134 = vmatprep.subr.mxu0 0.0
    %135 = vmatpush1.msra.mxu0 %v93
    %136 = vmatprep.subr.mxu0 0.0
    %137 = vmatpush1.msra.mxu0 %v94
    %138 = vmatprep.subr.mxu0 0.0
    %139 = vmatpush1.msra.mxu0 %v95
    %140 = vmatprep.subr.mxu0 0.0
    %141 = vmatpush1.msra.mxu0 %v96
    %142 = vmatprep.subr.mxu0 0.0
    %143 = vmatpush1.msra.mxu0 %v97
    %144 = vmatprep.subr.mxu0 0.0
    %145 = vmatpush1.msra.mxu0 %v98
    %146 = vmatprep.subr.mxu0 0.0
    %147 = vmatpush1.msra.mxu0 %v99
    %148 = vmatprep.subr.mxu0 0.0
    %149 = vmatpush1.msra.mxu0 %v100
    %150 = vmatprep.subr.mxu0 0.0
    %151 = vmatpush1.msra.mxu0 %v101
    %152 = vmatprep.subr.mxu0 0.0
    %153 = vmatpush1.msra.mxu0 %v102
    %154 = vmatprep.subr.mxu0 0.0
    %155 = vmatpush1.msra.mxu0 %v103
    %156 = vmatprep.subr.mxu0 0.0
    %157 = vmatpush1.msra.mxu0 %v104
    %158 = vmatprep.subr.mxu0 0.0
    %159 = vmatpush1.msra.mxu0 %v105
    %160 = vmatprep.subr.mxu0 0.0
    %161 = vmatpush1.msra.mxu0 %v106
    %162 = vmatprep.subr.mxu0 0.0
    %163 = vmatpush1.msra.mxu0 %v107
    %164 = vmatprep.subr.mxu0 0.0
    %165 = vmatpush1.msra.mxu0 %v108
    %166 = vmatprep.subr.mxu0 0.0
    %167 = vmatpush1.msra.mxu0 %v109
    %168 = vmatprep.subr.mxu0 0.0
    %169 = vmatpush1.msra.mxu0 %v110
    %170 = vmatprep.subr.mxu0 0.0
    %171 = vmatpush1.msra.mxu0 %v111
    %172 = vmatprep.subr.mxu0 0.0
    %173 = vmatpush1.msra.mxu0 %v112
    %174 = vmatprep.subr.mxu0 0.0
    %175 = vmatpush1.msra.mxu0 %v113
    %176 = vmatprep.subr.mxu0 0.0
    %177 = vmatpush1.msra.mxu0 %v114
    %178 = vmatprep.subr.mxu0 0.0
    %179 = vmatpush1.msra.mxu0 %v115
    %180 = vmatprep.mubr.f32.mxu0 %v83
    %181 = vmatmul.mubr.f32.gmra.mrb[0].mxu0 %v81
    %v182 = vpop.f32.mrb[0].mxu0
    %v183 = vadd.f32 0.0, %v182
    %v184 = vpop.f32.mrb[0].mxu0
    %185 = vdwg.mxu0
    %186 = vst [vmem:[#allocation7] sm:$0xff] %v183
    // Predicated region
    $region22: #{tpu_custom_call.1} parent=1 // pred_check
      _
    $region23: #{tpu_custom_call.1} parent=1 // pred_check_branch
      %188 = sbr.rel (0) target = $region25
    $region24: #{tpu_custom_call.1} parent=1 // pred_region
      %s190 = ssub.s32 128, 128
      %191 = vsyncadd [#allocation4], %s190
      %s193 = sshll.u32 [#allocation7], 4
      %s194 = int_to_ptr.vmem [resolvable:$true] %s193
      %196 = dma.vmem_to_hbm [thread:$0]  %s194, 128, %s3, [#allocation4]
    $region25: #{tpu_custom_call.1} parent=1 // pred_fallthru
      _
    // Predicated region
    $region26: #{tpu_custom_call.1} parent=1 // pred_check
      _
    $region27: #{tpu_custom_call.1} parent=1 // pred_check_branch
      %198 = sbr.rel (0) target = $region29
    $region28: #{tpu_custom_call.1} parent=1 // pred_region
      %199 = dma.done [#allocation4], 128
    $region29: #{tpu_custom_call.1} parent=1 // pred_fallthru
      _
    %200 = vsyncpa [#allocation3], 1
    %201 = vsyncpa [#allocation6], 1
    %202 = vsyncpa [#allocation4], 1

</llo_original>
